<compile_context>
chip_gen: v7x
topology: tpu7x:2x2x1
jax: 0.10.0
libtpu: 0.0.40
codegen_flags: <defaults>
</compile_context>

<pallas_src>
import jax
import jax.numpy as jnp
from jax import lax
from jax.experimental import pallas as pl
from jax.experimental.pallas import tpu as pltpu

ROBERTA_DIM = 768   # fixed by nn.Linear(768, hidden_dim)
HIDDEN = 32         # hidden_dim (small stand-in for 512)
NUM_HEADS = 8
HEAD_DIM = HIDDEN // NUM_HEADS
BATCH = 2
SEQ = 8


# ---------------------------------------------------------------------------
# Fused kernel: (uniform-softmax) MultiheadAttention + folded LSTM input
# projection + LSTM recurrence.  Whole problem resident in VMEM, no grid.
# ---------------------------------------------------------------------------
def _attn_lstm_kernel(h_ref, wfold_ref, bfold_ref, whh_ref, out_ref):
    B, S, H = h_ref.shape
    G = 4 * H

    # MultiheadAttention(query=h, key=c_expanded, value=h): every key row is
    # identical (== c), so the softmax over keys is exactly uniform and each
    # query's output is the per-batch mean of the value rows.  With the
    # value / out / LSTM-input projections folded into wfold/bfold (wrapper),
    # only the sublane mean over S remains here.
    h_mean = jnp.sum(h_ref[...], axis=1) * (1.0 / S)                    # (B, H)
    gates_x = (jnp.dot(h_mean, wfold_ref[...],
                       preferred_element_type=jnp.float32)
               + bfold_ref[...])                                        # (B, 4H)

    whh = whh_ref[...]                                                  # (H, 4H)

    # Lane mask for the tanh-activated gate group g (PyTorch gate order i,f,g,o),
    # hoisted out of the recurrence.
    lane = lax.broadcasted_iota(jnp.int32, (B, G), 1)
    g_lanes = (lane >= 2 * H) & (lane < 3 * H)

    h_t = jnp.zeros((B, H), jnp.float32)
    c_t = jnp.zeros((B, H), jnp.float32)
    hs = []
    # Fully unrolled, batch-vectorized recurrence (S=8, H=32 — tiny vreg
    # footprint).  At the real H=512 config: switch matmul operands to bf16
    # (f32 accumulate) and use lax.fori_loop(..., unroll=True) to bound vreg
    # live ranges instead of a static Python unroll.
    for t in range(S):
        gates = gates_x + jnp.dot(h_t, whh, preferred_element_type=jnp.float32)
        # one sigmoid push + one tanh push on the full (B, 4H) vreg, then a
        # lane select; the 32-lane gate extractions below land on the XLU slot.
        act = jnp.where(g_lanes, jnp.tanh(gates), jax.nn.sigmoid(gates))
        i_g = act[:, 0:H]
        f_g = act[:, H:2 * H]
        g_g = act[:, 2 * H:3 * H]
        o_g = act[:, 3 * H:4 * H]
        c_t = f_g * c_t + i_g * g_g
        h_t = o_g * jnp.tanh(c_t)
        hs.append(h_t)

    # Single lane-dense store: (B, S*H) with S*H = 256 lanes (multiple of 128).
    out_ref[...] = jnp.concatenate(hs, axis=-1).astype(out_ref.dtype)


def text_guided_core(c_raw, h, wc, bc, wqkv, bqkv, wo, bo, wih, whh, bih, bhh):
    """Returns (c, hat_h) of the trainable core of the module."""
    B, S, H = h.shape

    # condition_proj in plain XLA: c provably never feeds hat_h (uniform
    # softmax), so its K=768 matmul should not sit on the kernel's serial path.
    c = c_raw @ wc + bc[0]                                              # (B, H)

    # Fold value-proj -> out-proj -> LSTM-input-proj into one weight / bias
    # (exact up to f32 rounding; only the value slice of in_proj can affect
    # the output under the uniform softmax).
    wv = wqkv[:, 2 * H:3 * H]                                           # (H, H)
    bv = bqkv[:, 2 * H:3 * H]                                           # (1, H)
    w_fold = wv @ wo @ wih                                              # (H, 4H)
    b_fold = (bv @ wo + bo) @ wih + bih + bhh                           # (1, 4H)

    vmem = pl.BlockSpec(memory_space=pltpu.MemorySpace.VMEM)
    out_flat = pl.pallas_call(
        _attn_lstm_kernel,
        out_shape=jax.ShapeDtypeStruct((B, S * H), jnp.float32),
        in_specs=[vmem, vmem, vmem, vmem],
        out_specs=vmem,
    )(h, w_fold, b_fold, whh)

    hat_h = out_flat.reshape(B, S, H)   # row-major: metadata-only reshape
    return c, hat_h


# ---------------------------------------------------------------------------
# Pure-JAX reference: the FULL general path (q/k/v projections, 8 heads,
# softmax, out-proj, LSTM scan), matching PyTorch MHA/LSTM semantics.  This
# verifies that the uniform-softmax + weight-folding simplifications are exact.
# ---------------------------------------------------------------------------
def reference(c_raw, h, params):
    (wc, bc, wqkv, bqkv, wo, bo, wih, whh, bih, bhh) = params
    H = HIDDEN
    c = c_raw @ wc + bc[0]                               # (B, H)
    B, S, _ = h.shape
    c_exp = jnp.broadcast_to(c[:, None, :], (B, S, H))

    q = h @ wqkv[:, 0:H] + bqkv[0, 0:H]
    k = c_exp @ wqkv[:, H:2 * H] + bqkv[0, H:2 * H]
    v = h @ wqkv[:, 2 * H:3 * H] + bqkv[0, 2 * H:3 * H]

    def split(x):
        return x.reshape(B, S, NUM_HEADS, HEAD_DIM).transpose(0, 2, 1, 3)

    qh, kh, vh = split(q), split(k), split(v)
    s = jnp.einsum('bnqd,bnkd->bnqk', qh, kh) / (HEAD_DIM ** 0.5)
    p = jax.nn.softmax(s, axis=-1)
    o = jnp.einsum('bnqk,bnkd->bnqd', p, vh).transpose(0, 2, 1, 3).reshape(B, S, H)
    a = o @ wo + bo[0]

    def scan_fn(carry, xt):
        hp, cp = carry
        gates = xt @ wih + hp @ whh + bih[0] + bhh[0]
        i_g = jax.nn.sigmoid(gates[:, 0:H])
        f_g = jax.nn.sigmoid(gates[:, H:2 * H])
        g_g = jnp.tanh(gates[:, 2 * H:3 * H])
        o_g = jax.nn.sigmoid(gates[:, 3 * H:4 * H])
        cn = f_g * cp + i_g * g_g
        hn = o_g * jnp.tanh(cn)
        return (hn, cn), hn

    h0 = jnp.zeros((B, H), jnp.float32)
    c0 = jnp.zeros((B, H), jnp.float32)
    _, ys = lax.scan(scan_fn, (h0, c0), a.transpose(1, 0, 2))
    return c, ys.transpose(1, 0, 2)


# ---------------------------------------------------------------------------
if __name__ == "__main__":
    key = jax.random.PRNGKey(0)
    ks = jax.random.split(key, 12)

    # "encoder outputs": BART encoder last_hidden_state  h (B, S, H)
    h = jax.random.normal(ks[0], (BATCH, SEQ, HIDDEN), jnp.float32)
    # RoBERTa CLS token hidden state  c_raw (B, 768)
    c_raw = jax.random.normal(ks[1], (BATCH, ROBERTA_DIM), jnp.float32)

    scale = 0.05
    # condition_proj: PyTorch weight (H, 768) -> stored transposed (768, H)
    wc = scale * jax.random.normal(ks[2], (ROBERTA_DIM, HIDDEN), jnp.float32)
    bc = scale * jax.random.normal(ks[3], (1, HIDDEN), jnp.float32)
    # MultiheadAttention in_proj (3H, H) -> transposed (H, 3H), order [q|k|v]
    wqkv = scale * jax.random.normal(ks[4], (HIDDEN, 3 * HIDDEN), jnp.float32)
    bqkv = scale * jax.random.normal(ks[5], (1, 3 * HIDDEN), jnp.float32)
    wo = scale * jax.random.normal(ks[6], (HIDDEN, HIDDEN), jnp.float32)
    bo = scale * jax.random.normal(ks[7], (1, HIDDEN), jnp.float32)
    # LSTM weights (4H, H) -> transposed (H, 4H), gate order [i, f, g, o]
    wih = scale * jax.random.normal(ks[8], (HIDDEN, 4 * HIDDEN), jnp.float32)
    whh = scale * jax.random.normal(ks[9], (HIDDEN, 4 * HIDDEN), jnp.float32)
    bih = scale * jax.random.normal(ks[10], (1, 4 * HIDDEN), jnp.float32)
    bhh = scale * jax.random.normal(ks[11], (1, 4 * HIDDEN), jnp.float32)

    params = (wc, bc, wqkv, bqkv, wo, bo, wih, whh, bih, bhh)

    # ---- Pallas forward ------------------------------------------------------
    c, hat_h = text_guided_core(c_raw, h, *params)
    hat_h = jax.block_until_ready(hat_h)

    # TODO(synk): the frozen pretrained BART decoder (and its cross-entropy
    # loss / logits) and the sampling-based generate() loop are external
    # pretrained components and are not re-implemented; `hat_h` is the tensor
    # the PyTorch module passes to the decoder as encoder_outputs.

    # ---- correctness check vs full-path pure-JAX reference ------------------
    c_ref, hat_h_ref = reference(c_raw, h, params)
    assert jnp.allclose(c, c_ref, atol=1e-4, rtol=1e-4)
    assert jnp.allclose(hat_h, hat_h_ref, atol=1e-4, rtol=1e-4)

    print("KERNEL_OK")
</pallas_src>

<mosaic_0001>
module attributes {stable_mosaic.version = 11 : i64} {
  func.func @_attn_lstm_kernel(%arg0: memref<2x8x32xf32, #tpu.memory_space<vmem>>, %arg1: memref<32x128xf32, #tpu.memory_space<vmem>>, %arg2: memref<1x128xf32, #tpu.memory_space<vmem>>, %arg3: memref<32x128xf32, #tpu.memory_space<vmem>>, %arg4: memref<2x256xf32, #tpu.memory_space<vmem>>) attributes {dimension_semantics = [], scalar_prefetch = 0 : i64, scratch_operands = 0 : i64, tpu.core_type = #tpu.core_type<tc>} {
    %c0 = arith.constant 0 : index
    %c0_0 = arith.constant 0 : index
    %c0_1 = arith.constant 0 : index
    %0 = vector.load %arg0[%c0, %c0_0, %c0_1] : memref<2x8x32xf32, #tpu.memory_space<vmem>>, vector<2x8x32xf32>
    %cst = arith.constant dense<0.000000e+00> : vector<2x32xf32>
    %1 = vector.multi_reduction <add>, %0, %cst [1] : vector<2x8x32xf32> to vector<2x32xf32>
    %cst_2 = arith.constant 1.250000e-01 : f32
    %2 = vector.broadcast %cst_2 : f32 to vector<2x32xf32>
    %3 = arith.mulf %1, %2 : vector<2x32xf32>
    %c0_3 = arith.constant 0 : index
    %c0_4 = arith.constant 0 : index
    %4 = vector.load %arg1[%c0_3, %c0_4] : memref<32x128xf32, #tpu.memory_space<vmem>>, vector<32x128xf32>
    %cst_5 = arith.constant dense<0.000000e+00> : vector<2x128xf32>
    %5 = tpu.matmul %3, %4, %cst_5 {dimension_numbers = #tpu.dot_dimension_numbers<[1], [0], [0], [1], [0, 0, 1, 1], [], []>} : vector<2x32xf32>, vector<32x128xf32>, vector<2x128xf32> -> vector<2x128xf32>
    %c0_6 = arith.constant 0 : index
    %c0_7 = arith.constant 0 : index
    %6 = vector.load %arg2[%c0_6, %c0_7] : memref<1x128xf32, #tpu.memory_space<vmem>>, vector<1x128xf32>
    %7 = vector.broadcast %6 : vector<1x128xf32> to vector<2x128xf32>
    %8 = arith.addf %5, %7 : vector<2x128xf32>
    %c0_8 = arith.constant 0 : index
    %c0_9 = arith.constant 0 : index
    %9 = vector.load %arg3[%c0_8, %c0_9] : memref<32x128xf32, #tpu.memory_space<vmem>>, vector<32x128xf32>
    %10 = tpu.iota {dimensions = array<i32: 1>} : vector<2x128xi32>
    %c64_i32 = arith.constant 64 : i32
    %11 = vector.broadcast %c64_i32 : i32 to vector<2x128xi32>
    %12 = arith.cmpi sge, %10, %11 : vector<2x128xi32>
    %c96_i32 = arith.constant 96 : i32
    %13 = vector.broadcast %c96_i32 : i32 to vector<2x128xi32>
    %14 = arith.cmpi slt, %10, %13 : vector<2x128xi32>
    %15 = arith.andi %12, %14 : vector<2x128xi1>
    %cst_10 = arith.constant 0.000000e+00 : f32
    %16 = vector.broadcast %cst_10 : f32 to vector<2x32xf32>
    %cst_11 = arith.constant 0.000000e+00 : f32
    %17 = vector.broadcast %cst_11 : f32 to vector<2x32xf32>
    %cst_12 = arith.constant dense<0.000000e+00> : vector<2x128xf32>
    %18 = tpu.matmul %16, %9, %cst_12 {dimension_numbers = #tpu.dot_dimension_numbers<[1], [0], [0], [1], [0, 0, 1, 1], [], []>} : vector<2x32xf32>, vector<32x128xf32>, vector<2x128xf32> -> vector<2x128xf32>
    %19 = arith.addf %8, %18 : vector<2x128xf32>
    %20 = math.tanh %19 : vector<2x128xf32>
    %21 = arith.negf %19 : vector<2x128xf32>
    %22 = math.exp %21 : vector<2x128xf32>
    %cst_13 = arith.constant 1.000000e+00 : f32
    %23 = vector.broadcast %cst_13 : f32 to vector<2x128xf32>
    %24 = arith.addf %23, %22 : vector<2x128xf32>
    %25 = arith.divf %23, %24 : vector<2x128xf32>
    %26 = arith.select %15, %20, %25 : vector<2x128xi1>, vector<2x128xf32>
    %27 = vector.extract_strided_slice %26 {offsets = [0, 0], sizes = [2, 32], strides = [1, 1]} : vector<2x128xf32> to vector<2x32xf32>
    %28 = vector.extract_strided_slice %26 {offsets = [0, 32], sizes = [2, 32], strides = [1, 1]} : vector<2x128xf32> to vector<2x32xf32>
    %29 = vector.extract_strided_slice %26 {offsets = [0, 64], sizes = [2, 32], strides = [1, 1]} : vector<2x128xf32> to vector<2x32xf32>
    %30 = vector.extract_strided_slice %26 {offsets = [0, 96], sizes = [2, 32], strides = [1, 1]} : vector<2x128xf32> to vector<2x32xf32>
    %31 = arith.mulf %28, %17 : vector<2x32xf32>
    %32 = arith.mulf %27, %29 : vector<2x32xf32>
    %33 = arith.addf %31, %32 : vector<2x32xf32>
    %34 = math.tanh %33 : vector<2x32xf32>
    %35 = arith.mulf %30, %34 : vector<2x32xf32>
    %cst_14 = arith.constant dense<0.000000e+00> : vector<2x128xf32>
    %36 = tpu.matmul %35, %9, %cst_14 {dimension_numbers = #tpu.dot_dimension_numbers<[1], [0], [0], [1], [0, 0, 1, 1], [], []>} : vector<2x32xf32>, vector<32x128xf32>, vector<2x128xf32> -> vector<2x128xf32>
    %37 = arith.addf %8, %36 : vector<2x128xf32>
    %38 = math.tanh %37 : vector<2x128xf32>
    %39 = arith.negf %37 : vector<2x128xf32>
    %40 = math.exp %39 : vector<2x128xf32>
    %cst_15 = arith.constant 1.000000e+00 : f32
    %41 = vector.broadcast %cst_15 : f32 to vector<2x128xf32>
    %42 = arith.addf %41, %40 : vector<2x128xf32>
    %43 = arith.divf %41, %42 : vector<2x128xf32>
    %44 = arith.select %15, %38, %43 : vector<2x128xi1>, vector<2x128xf32>
    %45 = vector.extract_strided_slice %44 {offsets = [0, 0], sizes = [2, 32], strides = [1, 1]} : vector<2x128xf32> to vector<2x32xf32>
    %46 = vector.extract_strided_slice %44 {offsets = [0, 32], sizes = [2, 32], strides = [1, 1]} : vector<2x128xf32> to vector<2x32xf32>
    %47 = vector.extract_strided_slice %44 {offsets = [0, 64], sizes = [2, 32], strides = [1, 1]} : vector<2x128xf32> to vector<2x32xf32>
    %48 = vector.extract_strided_slice %44 {offsets = [0, 96], sizes = [2, 32], strides = [1, 1]} : vector<2x128xf32> to vector<2x32xf32>
    %49 = arith.mulf %46, %33 : vector<2x32xf32>
    %50 = arith.mulf %45, %47 : vector<2x32xf32>
    %51 = arith.addf %49, %50 : vector<2x32xf32>
    %52 = math.tanh %51 : vector<2x32xf32>
    %53 = arith.mulf %48, %52 : vector<2x32xf32>
    %cst_16 = arith.constant dense<0.000000e+00> : vector<2x128xf32>
    %54 = tpu.matmul %53, %9, %cst_16 {dimension_numbers = #tpu.dot_dimension_numbers<[1], [0], [0], [1], [0, 0, 1, 1], [], []>} : vector<2x32xf32>, vector<32x128xf32>, vector<2x128xf32> -> vector<2x128xf32>
    %55 = arith.addf %8, %54 : vector<2x128xf32>
    %56 = math.tanh %55 : vector<2x128xf32>
    %57 = arith.negf %55 : vector<2x128xf32>
    %58 = math.exp %57 : vector<2x128xf32>
    %cst_17 = arith.constant 1.000000e+00 : f32
    %59 = vector.broadcast %cst_17 : f32 to vector<2x128xf32>
    %60 = arith.addf %59, %58 : vector<2x128xf32>
    %61 = arith.divf %59, %60 : vector<2x128xf32>
    %62 = arith.select %15, %56, %61 : vector<2x128xi1>, vector<2x128xf32>
    %63 = vector.extract_strided_slice %62 {offsets = [0, 0], sizes = [2, 32], strides = [1, 1]} : vector<2x128xf32> to vector<2x32xf32>
    %64 = vector.extract_strided_slice %62 {offsets = [0, 32], sizes = [2, 32], strides = [1, 1]} : vector<2x128xf32> to vector<2x32xf32>
    %65 = vector.extract_strided_slice %62 {offsets = [0, 64], sizes = [2, 32], strides = [1, 1]} : vector<2x128xf32> to vector<2x32xf32>
    %66 = vector.extract_strided_slice %62 {offsets = [0, 96], sizes = [2, 32], strides = [1, 1]} : vector<2x128xf32> to vector<2x32xf32>
    %67 = arith.mulf %64, %51 : vector<2x32xf32>
    %68 = arith.mulf %63, %65 : vector<2x32xf32>
    %69 = arith.addf %67, %68 : vector<2x32xf32>
    %70 = math.tanh %69 : vector<2x32xf32>
    %71 = arith.mulf %66, %70 : vector<2x32xf32>
    %cst_18 = arith.constant dense<0.000000e+00> : vector<2x128xf32>
    %72 = tpu.matmul %71, %9, %cst_18 {dimension_numbers = #tpu.dot_dimension_numbers<[1], [0], [0], [1], [0, 0, 1, 1], [], []>} : vector<2x32xf32>, vector<32x128xf32>, vector<2x128xf32> -> vector<2x128xf32>
    %73 = arith.addf %8, %72 : vector<2x128xf32>
    %74 = math.tanh %73 : vector<2x128xf32>
    %75 = arith.negf %73 : vector<2x128xf32>
    %76 = math.exp %75 : vector<2x128xf32>
    %cst_19 = arith.constant 1.000000e+00 : f32
    %77 = vector.broadcast %cst_19 : f32 to vector<2x128xf32>
    %78 = arith.addf %77, %76 : vector<2x128xf32>
    %79 = arith.divf %77, %78 : vector<2x128xf32>
    %80 = arith.select %15, %74, %79 : vector<2x128xi1>, vector<2x128xf32>
    %81 = vector.extract_strided_slice %80 {offsets = [0, 0], sizes = [2, 32], strides = [1, 1]} : vector<2x128xf32> to vector<2x32xf32>
    %82 = vector.extract_strided_slice %80 {offsets = [0, 32], sizes = [2, 32], strides = [1, 1]} : vector<2x128xf32> to vector<2x32xf32>
    %83 = vector.extract_strided_slice %80 {offsets = [0, 64], sizes = [2, 32], strides = [1, 1]} : vector<2x128xf32> to vector<2x32xf32>
    %84 = vector.extract_strided_slice %80 {offsets = [0, 96], sizes = [2, 32], strides = [1, 1]} : vector<2x128xf32> to vector<2x32xf32>
    %85 = arith.mulf %82, %69 : vector<2x32xf32>
    %86 = arith.mulf %81, %83 : vector<2x32xf32>
    %87 = arith.addf %85, %86 : vector<2x32xf32>
    %88 = math.tanh %87 : vector<2x32xf32>
    %89 = arith.mulf %84, %88 : vector<2x32xf32>
    %cst_20 = arith.constant dense<0.000000e+00> : vector<2x128xf32>
    %90 = tpu.matmul %89, %9, %cst_20 {dimension_numbers = #tpu.dot_dimension_numbers<[1], [0], [0], [1], [0, 0, 1, 1], [], []>} : vector<2x32xf32>, vector<32x128xf32>, vector<2x128xf32> -> vector<2x128xf32>
    %91 = arith.addf %8, %90 : vector<2x128xf32>
    %92 = math.tanh %91 : vector<2x128xf32>
    %93 = arith.negf %91 : vector<2x128xf32>
    %94 = math.exp %93 : vector<2x128xf32>
    %cst_21 = arith.constant 1.000000e+00 : f32
    %95 = vector.broadcast %cst_21 : f32 to vector<2x128xf32>
    %96 = arith.addf %95, %94 : vector<2x128xf32>
    %97 = arith.divf %95, %96 : vector<2x128xf32>
    %98 = arith.select %15, %92, %97 : vector<2x128xi1>, vector<2x128xf32>
    %99 = vector.extract_strided_slice %98 {offsets = [0, 0], sizes = [2, 32], strides = [1, 1]} : vector<2x128xf32> to vector<2x32xf32>
    %100 = vector.extract_strided_slice %98 {offsets = [0, 32], sizes = [2, 32], strides = [1, 1]} : vector<2x128xf32> to vector<2x32xf32>
    %101 = vector.extract_strided_slice %98 {offsets = [0, 64], sizes = [2, 32], strides = [1, 1]} : vector<2x128xf32> to vector<2x32xf32>
    %102 = vector.extract_strided_slice %98 {offsets = [0, 96], sizes = [2, 32], strides = [1, 1]} : vector<2x128xf32> to vector<2x32xf32>
    %103 = arith.mulf %100, %87 : vector<2x32xf32>
    %104 = arith.mulf %99, %101 : vector<2x32xf32>
    %105 = arith.addf %103, %104 : vector<2x32xf32>
    %106 = math.tanh %105 : vector<2x32xf32>
    %107 = arith.mulf %102, %106 : vector<2x32xf32>
    %cst_22 = arith.constant dense<0.000000e+00> : vector<2x128xf32>
    %108 = tpu.matmul %107, %9, %cst_22 {dimension_numbers = #tpu.dot_dimension_numbers<[1], [0], [0], [1], [0, 0, 1, 1], [], []>} : vector<2x32xf32>, vector<32x128xf32>, vector<2x128xf32> -> vector<2x128xf32>
    %109 = arith.addf %8, %108 : vector<2x128xf32>
    %110 = math.tanh %109 : vector<2x128xf32>
    %111 = arith.negf %109 : vector<2x128xf32>
    %112 = math.exp %111 : vector<2x128xf32>
    %cst_23 = arith.constant 1.000000e+00 : f32
    %113 = vector.broadcast %cst_23 : f32 to vector<2x128xf32>
    %114 = arith.addf %113, %112 : vector<2x128xf32>
    %115 = arith.divf %113, %114 : vector<2x128xf32>
    %116 = arith.select %15, %110, %115 : vector<2x128xi1>, vector<2x128xf32>
    %117 = vector.extract_strided_slice %116 {offsets = [0, 0], sizes = [2, 32], strides = [1, 1]} : vector<2x128xf32> to vector<2x32xf32>
    %118 = vector.extract_strided_slice %116 {offsets = [0, 32], sizes = [2, 32], strides = [1, 1]} : vector<2x128xf32> to vector<2x32xf32>
    %119 = vector.extract_strided_slice %116 {offsets = [0, 64], sizes = [2, 32], strides = [1, 1]} : vector<2x128xf32> to vector<2x32xf32>
    %120 = vector.extract_strided_slice %116 {offsets = [0, 96], sizes = [2, 32], strides = [1, 1]} : vector<2x128xf32> to vector<2x32xf32>
    %121 = arith.mulf %118, %105 : vector<2x32xf32>
    %122 = arith.mulf %117, %119 : vector<2x32xf32>
    %123 = arith.addf %121, %122 : vector<2x32xf32>
    %124 = math.tanh %123 : vector<2x32xf32>
    %125 = arith.mulf %120, %124 : vector<2x32xf32>
    %cst_24 = arith.constant dense<0.000000e+00> : vector<2x128xf32>
    %126 = tpu.matmul %125, %9, %cst_24 {dimension_numbers = #tpu.dot_dimension_numbers<[1], [0], [0], [1], [0, 0, 1, 1], [], []>} : vector<2x32xf32>, vector<32x128xf32>, vector<2x128xf32> -> vector<2x128xf32>
    %127 = arith.addf %8, %126 : vector<2x128xf32>
    %128 = math.tanh %127 : vector<2x128xf32>
    %129 = arith.negf %127 : vector<2x128xf32>
    %130 = math.exp %129 : vector<2x128xf32>
    %cst_25 = arith.constant 1.000000e+00 : f32
    %131 = vector.broadcast %cst_25 : f32 to vector<2x128xf32>
    %132 = arith.addf %131, %130 : vector<2x128xf32>
    %133 = arith.divf %131, %132 : vector<2x128xf32>
    %134 = arith.select %15, %128, %133 : vector<2x128xi1>, vector<2x128xf32>
    %135 = vector.extract_strided_slice %134 {offsets = [0, 0], sizes = [2, 32], strides = [1, 1]} : vector<2x128xf32> to vector<2x32xf32>
    %136 = vector.extract_strided_slice %134 {offsets = [0, 32], sizes = [2, 32], strides = [1, 1]} : vector<2x128xf32> to vector<2x32xf32>
    %137 = vector.extract_strided_slice %134 {offsets = [0, 64], sizes = [2, 32], strides = [1, 1]} : vector<2x128xf32> to vector<2x32xf32>
    %138 = vector.extract_strided_slice %134 {offsets = [0, 96], sizes = [2, 32], strides = [1, 1]} : vector<2x128xf32> to vector<2x32xf32>
    %139 = arith.mulf %136, %123 : vector<2x32xf32>
    %140 = arith.mulf %135, %137 : vector<2x32xf32>
    %141 = arith.addf %139, %140 : vector<2x32xf32>
    %142 = math.tanh %141 : vector<2x32xf32>
    %143 = arith.mulf %138, %142 : vector<2x32xf32>
    %cst_26 = arith.constant dense<0.000000e+00> : vector<2x128xf32>
    %144 = tpu.matmul %143, %9, %cst_26 {dimension_numbers = #tpu.dot_dimension_numbers<[1], [0], [0], [1], [0, 0, 1, 1], [], []>} : vector<2x32xf32>, vector<32x128xf32>, vector<2x128xf32> -> vector<2x128xf32>
    %145 = arith.addf %8, %144 : vector<2x128xf32>
    %146 = math.tanh %145 : vector<2x128xf32>
    %147 = arith.negf %145 : vector<2x128xf32>
    %148 = math.exp %147 : vector<2x128xf32>
    %cst_27 = arith.constant 1.000000e+00 : f32
    %149 = vector.broadcast %cst_27 : f32 to vector<2x128xf32>
    %150 = arith.addf %149, %148 : vector<2x128xf32>
    %151 = arith.divf %149, %150 : vector<2x128xf32>
    %152 = arith.select %15, %146, %151 : vector<2x128xi1>, vector<2x128xf32>
    %153 = vector.extract_strided_slice %152 {offsets = [0, 0], sizes = [2, 32], strides = [1, 1]} : vector<2x128xf32> to vector<2x32xf32>
    %154 = vector.extract_strided_slice %152 {offsets = [0, 32], sizes = [2, 32], strides = [1, 1]} : vector<2x128xf32> to vector<2x32xf32>
    %155 = vector.extract_strided_slice %152 {offsets = [0, 64], sizes = [2, 32], strides = [1, 1]} : vector<2x128xf32> to vector<2x32xf32>
    %156 = vector.extract_strided_slice %152 {offsets = [0, 96], sizes = [2, 32], strides = [1, 1]} : vector<2x128xf32> to vector<2x32xf32>
    %157 = arith.mulf %154, %141 : vector<2x32xf32>
    %158 = arith.mulf %153, %155 : vector<2x32xf32>
    %159 = arith.addf %157, %158 : vector<2x32xf32>
    %160 = math.tanh %159 : vector<2x32xf32>
    %161 = arith.mulf %156, %160 : vector<2x32xf32>
    %162 = tpu.concatenate %35, %53, %71, %89, %107, %125, %143, %161 in 1 : vector<2x32xf32>, vector<2x32xf32>, vector<2x32xf32>, vector<2x32xf32>, vector<2x32xf32>, vector<2x32xf32>, vector<2x32xf32>, vector<2x32xf32> -> vector<2x256xf32>
    %c0_28 = arith.constant 0 : index
    %c0_29 = arith.constant 0 : index
    %163 = vector.load %arg4[%c0_28, %c0_29] : memref<2x256xf32, #tpu.memory_space<vmem>>, vector<2x256xf32>
    tpu.vector_store %arg4[%c0_28, %c0_29], %162 {strides = array<i32>} : memref<2x256xf32, #tpu.memory_space<vmem>>, vector<2x256xf32>,
    return
  }
}

</mosaic_0001>

<llo_original>
// kernel: tpu_custom_call.1
$region0: #{tpu_custom_call.1}
  #allocation0 [shape = 'u32[]', space=smem, size = 0x4, offset = 0x4, fixed_abs, tag = 'smem constant byte address 0x4 - core index']
  #allocation1 [shape = 'u32[144,128]{1,0:T(1,128)}', space=vmem, size = 0x12000, scoped, tag = 'internal scratch']
  %s0 = inlined_call_operand.hbm [shape: f32[2,8,32], index: 0, kind: input, shape index: {}]
  %s1 = inlined_call_operand.hbm [shape: f32[32,128], index: 1, kind: input, shape index: {}]
  %s2 = inlined_call_operand.vmem [shape: f32[1,128], index: 2, kind: input, shape index: {}]
  %s3 = inlined_call_operand.hbm [shape: f32[32,128], index: 3, kind: input, shape index: {}]
  %s4 = inlined_call_operand.hbm [shape: f32[2,256], index: 4, kind: output, shape index: {}]
  %s5 = sld [smem:[#allocation0]]
  $region38: #{tpu_custom_call.1} parent=0
    _
  %s7 = ssub.s32 1, %s5
  %s8 = scalar_select 0, %s7, %s5
  $region1: #{tpu_custom_call.1} parent=0
    #allocation2 [shape = 'u8[8192]{0}', space=vmem, size = 0x2000, scoped, tag = 'input window, operand 0, single buffered']
    #allocation3 [shape = 's32[1]{0}', space=sflag, size = 0x4, scoped, tag = 'scoped memory for tpu_custom_call.1']
    #allocation4 [shape = 's32[1]{0}', space=sflag, size = 0x4, scoped, tag = 'scoped memory for tpu_custom_call.1']
    #allocation5 [shape = 'u8[16384]{0}', space=vmem, size = 0x4000, scoped, tag = 'input window, operand 1, single buffered']
    #allocation6 [shape = 's32[1]{0}', space=sflag, size = 0x4, scoped, tag = 'scoped memory for tpu_custom_call.1']
    #allocation7 [shape = 'u8[16384]{0}', space=vmem, size = 0x4000, scoped, tag = 'input window, operand 3, single buffered']
    #allocation8 [shape = 'u8[2048]{0}', space=vmem, size = 0x800, scoped, tag = 'output window, operand 0, single buffered']
    %9 = vsyncpa [#allocation3], 0
    %10 = vsyncpa [#allocation6], 0
    %11 = vsyncpa [#allocation4], 0
    // Predicated region
    $region2: #{tpu_custom_call.1} parent=1 // pred_check
      _
    $region3: #{tpu_custom_call.1} parent=1 // pred_check_branch
      %13 = sbr.rel (0) target = $region5
    $region4: #{tpu_custom_call.1} parent=1 // pred_region
      %s15 = ssub.s32 256, 256
      %16 = vsyncadd [#allocation3], %s15
      %s17 = sshll.u32 [#allocation2], 4
      %s18 = int_to_ptr.vmem [resolvable:$true] %s17
      %23 = dma.hbm_to_vmem [thread:$0]  %s0, 256, %s18, [#allocation3], 128, 128, 8
    $region5: #{tpu_custom_call.1} parent=1 // pred_fallthru
      _
    // Predicated region
    $region6: #{tpu_custom_call.1} parent=1 // pred_check
      _
    $region7: #{tpu_custom_call.1} parent=1 // pred_check_branch
      %25 = sbr.rel (0) target = $region9
    $region8: #{tpu_custom_call.1} parent=1 // pred_region
      %s27 = ssub.s32 512, 512
      %28 = vsyncadd [#allocation6], %s27
      %s29 = sshll.u32 [#allocation5], 4
      %s30 = int_to_ptr.vmem [resolvable:$true] %s29
      %35 = dma.hbm_to_vmem [thread:$0]  %s1, 512, %s30, [#allocation6], 128, 128, 8
    $region9: #{tpu_custom_call.1} parent=1 // pred_fallthru
      _
    // Predicated region
    $region10: #{tpu_custom_call.1} parent=1 // pred_check
      _
    $region11: #{tpu_custom_call.1} parent=1 // pred_check_branch
      %37 = sbr.rel (0) target = $region13
    $region12: #{tpu_custom_call.1} parent=1 // pred_region
      _
    $region13: #{tpu_custom_call.1} parent=1 // pred_fallthru
      _
    // Predicated region
    $region14: #{tpu_custom_call.1} parent=1 // pred_check
      _
    $region15: #{tpu_custom_call.1} parent=1 // pred_check_branch
      %39 = sbr.rel (0) target = $region17
    $region16: #{tpu_custom_call.1} parent=1 // pred_region
      %s41 = ssub.s32 512, 512
      %42 = vsyncadd [#allocation6], %s41
      %s43 = sshll.u32 [#allocation7], 4
      %s44 = int_to_ptr.vmem [resolvable:$true] %s43
      %49 = dma.hbm_to_vmem [thread:$0]  %s3, 512, %s44, [#allocation6], 128, 128, 8
    $region17: #{tpu_custom_call.1} parent=1 // pred_fallthru
      _
    // Predicated region
    $region18: #{tpu_custom_call.1} parent=1 // pred_check
      _
    $region19: #{tpu_custom_call.1} parent=1 // pred_check_branch
      %51 = sbr.rel (0) target = $region21
    $region20: #{tpu_custom_call.1} parent=1 // pred_region
      %52 = dma.done [#allocation3], 256
    $region21: #{tpu_custom_call.1} parent=1 // pred_fallthru
      _
    // Predicated region
    $region22: #{tpu_custom_call.1} parent=1 // pred_check
      _
    $region23: #{tpu_custom_call.1} parent=1 // pred_check_branch
      %54 = sbr.rel (0) target = $region25
    $region24: #{tpu_custom_call.1} parent=1 // pred_region
      %55 = dma.done [#allocation6], 512
    $region25: #{tpu_custom_call.1} parent=1 // pred_fallthru
      _
    // Predicated region
    $region26: #{tpu_custom_call.1} parent=1 // pred_check
      _
    $region27: #{tpu_custom_call.1} parent=1 // pred_check_branch
      %57 = sbr.rel (0) target = $region29
    $region28: #{tpu_custom_call.1} parent=1 // pred_region
      %58 = dma.done [#allocation6], 512
    $region29: #{tpu_custom_call.1} parent=1 // pred_fallthru
      _
    %v59 = vld [vmem:[#allocation2] sm:$0xff]
    %v60 = vld [vmem:[#allocation2 + $0x8] sm:$0xff]
    %vm61 = vcmask 261120
    %v62 = vsel %vm61, %v59, 0.0
    %v63 = vrot.slane %v62, 4
    %v64 = vadd.f32 %v62, %v63
    %v65 = vrot.slane %v64, 2
    %v66 = vadd.f32 %v64, %v65
    %v67 = vrot.slane %v66, 1
    %v68 = vadd.f32 %v66, %v67
    %v69 = vsel %vm61, %v60, 0.0
    %v70 = vrot.slane %v69, 4
    %v71 = vadd.f32 %v69, %v70
    %v72 = vrot.slane %v71, 2
    %v73 = vadd.f32 %v71, %v72
    %v74 = vrot.slane %v73, 1
    %v75 = vadd.f32 %v73, %v74
    %v76 = vmul.f32 %v68, 0.125
    %v77 = vmul.f32 %v75, 0.125
    %v78 = vld [vmem:[#allocation5] sm:$0xff]
    %v79 = vld [vmem:[#allocation5 + $0x8] sm:$0xff]
    %v80 = vld [vmem:[#allocation5 + $0x10] sm:$0xff]
    %v81 = vld [vmem:[#allocation5 + $0x18] sm:$0xff]
    %v82 = vld [vmem:[%s2] sm:$0x1]
    %v84 = vlaneseq
    %v85 = vshrl.u32 %v84, 7
    %v86 = vsub.s32 0, %v85
    %v87 = vrot.slane %v82, %v86
    %vm91 = vcmask 1041409
    %v92 = vsel %vm91, %v77, %v76
    %v93 = vsel %vm61, %v92, 0
    %95 = vmatprep.subr.mxu0 0.0
    %96 = vmatpush1.msra.mxu0 %v78
    %97 = vmatprep.subr.mxu0 0.0
    %98 = vmatpush1.msra.mxu0 %v79
    %99 = vmatprep.subr.mxu0 0.0
    %100 = vmatpush1.msra.mxu0 %v80
    %101 = vmatprep.subr.mxu0 0.0
    %102 = vmatpush1.msra.mxu0 %v81
    %103 = vmatprep.subr.mxu0 0.0
    %104 = vmatpush1.msra.mxu0 0.0
    %105 = vmatprep.subr.mxu0 0.0
    %106 = vmatpush1.msra.mxu0 0.0
    %107 = vmatprep.subr.mxu0 0.0
    %108 = vmatpush1.msra.mxu0 0.0
    %109 = vmatprep.subr.mxu0 0.0
    %110 = vmatpush1.msra.mxu0 0.0
    %111 = vmatprep.subr.mxu0 0.0
    %112 = vmatpush1.msra.mxu0 0.0
    %113 = vmatprep.subr.mxu0 0.0
    %114 = vmatpush1.msra.mxu0 0.0
    %115 = vmatprep.subr.mxu0 0.0
    %116 = vmatpush1.msra.mxu0 0.0
    %117 = vmatprep.subr.mxu0 0.0
    %118 = vmatpush1.msra.mxu0 0.0
    %119 = vmatprep.subr.mxu0 0.0
    %120 = vmatpush1.msra.mxu0 0.0
    %121 = vmatprep.subr.mxu0 0.0
    %122 = vmatpush1.msra.mxu0 0.0
    %123 = vmatprep.subr.mxu0 0.0
    %124 = vmatpush1.msra.mxu0 0.0
    %125 = vmatprep.subr.mxu0 0.0
    %126 = vmatpush1.msra.mxu0 0.0
    %127 = vmatprep.subr.mxu0 0.0
    %128 = vmatpush1.msra.mxu0 0.0
    %129 = vmatprep.subr.mxu0 0.0
    %130 = vmatpush1.msra.mxu0 0.0
    %131 = vmatprep.subr.mxu0 0.0
    %132 = vmatpush1.msra.mxu0 0.0
    %133 = vmatprep.subr.mxu0 0.0
    %134 = vmatpush1.msra.mxu0 0.0
    %135 = vmatprep.subr.mxu0 0.0
    %136 = vmatpush1.msra.mxu0 0.0
    %137 = vmatprep.subr.mxu0 0.0
    %138 = vmatpush1.msra.mxu0 0.0
    %139 = vmatprep.subr.mxu0 0.0
    %140 = vmatpush1.msra.mxu0 0.0
    %141 = vmatprep.subr.mxu0 0.0
    %142 = vmatpush1.msra.mxu0 0.0
    %143 = vmatprep.subr.mxu0 0.0
    %144 = vmatpush1.msra.mxu0 0.0
    %145 = vmatprep.subr.mxu0 0.0
    %146 = vmatpush1.msra.mxu0 0.0
    %147 = vmatprep.subr.mxu0 0.0
    %148 = vmatpush1.msra.mxu0 0.0
    %149 = vmatprep.subr.mxu0 0.0
    %150 = vmatpush1.msra.mxu0 0.0
    %151 = vmatprep.subr.mxu0 0.0
    %152 = vmatpush1.msra.mxu0 0.0
    %153 = vmatprep.subr.mxu0 0.0
    %154 = vmatpush1.msra.mxu0 0.0
    %155 = vmatprep.subr.mxu0 0.0
    %156 = vmatpush1.msra.mxu0 0.0
    %157 = vmatprep.subr.mxu0 0.0
    %158 = vmatpush1.msra.mxu0 0.0
    %159 = vmatprep.mubr.f32.mxu0 0.0
    %160 = vmatmul.mubr.f32.gmra.mrb[0].mxu0 %v93
    %v161 = vpop.f32.mrb[0].mxu0
    %v162 = vadd.f32 %v87, %v161
    %v163 = vpop.f32.mrb[0].mxu0
    %164 = vdwg.mxu0
    %v165 = vld [vmem:[#allocation7] sm:$0xff]
    %v166 = vld [vmem:[#allocation7 + $0x8] sm:$0xff]
    %v167 = vld [vmem:[#allocation7 + $0x10] sm:$0xff]
    %v168 = vld [vmem:[#allocation7 + $0x18] sm:$0xff]
    %v169 = vlaneseq
    %v170 = vand.u32 %v169, 127
    %vm171 = vcmp.ge.s32.totalorder %v170, 64
    %vm172 = vcmp.lt.s32.totalorder %v170, 96
    %vm173 = vmand %vm171, %vm172
    %v175 = vsel %vm61, 0.0, 0
    %177 = vmatprep.subr.mxu0 0.0
    %178 = vmatpush1.msra.mxu0 %v165
    %179 = vmatprep.subr.mxu0 0.0
    %180 = vmatpush1.msra.mxu0 %v166
    %181 = vmatprep.subr.mxu0 0.0
    %182 = vmatpush1.msra.mxu0 %v167
    %183 = vmatprep.subr.mxu0 0.0
    %184 = vmatpush1.msra.mxu0 %v168
    %185 = vmatprep.subr.mxu0 0.0
    %186 = vmatpush1.msra.mxu0 0.0
    %187 = vmatprep.subr.mxu0 0.0
    %188 = vmatpush1.msra.mxu0 0.0
    %189 = vmatprep.subr.mxu0 0.0
    %190 = vmatpush1.msra.mxu0 0.0
    %191 = vmatprep.subr.mxu0 0.0
    %192 = vmatpush1.msra.mxu0 0.0
    %193 = vmatprep.subr.mxu0 0.0
    %194 = vmatpush1.msra.mxu0 0.0
    %195 = vmatprep.subr.mxu0 0.0
    %196 = vmatpush1.msra.mxu0 0.0
    %197 = vmatprep.subr.mxu0 0.0
    %198 = vmatpush1.msra.mxu0 0.0
    %199 = vmatprep.subr.mxu0 0.0
    %200 = vmatpush1.msra.mxu0 0.0
    %201 = vmatprep.subr.mxu0 0.0
    %202 = vmatpush1.msra.mxu0 0.0
    %203 = vmatprep.subr.mxu0 0.0
    %204 = vmatpush1.msra.mxu0 0.0
    %205 = vmatprep.subr.mxu0 0.0
    %206 = vmatpush1.msra.mxu0 0.0
    %207 = vmatprep.subr.mxu0 0.0
    %208 = vmatpush1.msra.mxu0 0.0
    %209 = vmatprep.subr.mxu0 0.0
    %210 = vmatpush1.msra.mxu0 0.0
    %211 = vmatprep.subr.mxu0 0.0
    %212 = vmatpush1.msra.mxu0 0.0
    %213 = vmatprep.subr.mxu0 0.0
    %214 = vmatpush1.msra.mxu0 0.0
    %215 = vmatprep.subr.mxu0 0.0
    %216 = vmatpush1.msra.mxu0 0.0
    %217 = vmatprep.subr.mxu0 0.0
    %218 = vmatpush1.msra.mxu0 0.0
    %219 = vmatprep.subr.mxu0 0.0
    %220 = vmatpush1.msra.mxu0 0.0
    %221 = vmatprep.subr.mxu0 0.0
    %222 = vmatpush1.msra.mxu0 0.0
    %223 = vmatprep.subr.mxu0 0.0
    %224 = vmatpush1.msra.mxu0 0.0
    %225 = vmatprep.subr.mxu0 0.0
    %226 = vmatpush1.msra.mxu0 0.0
    %227 = vmatprep.subr.mxu0 0.0
    %228 = vmatpush1.msra.mxu0 0.0
    %229 = vmatprep.subr.mxu0 0.0
    %230 = vmatpush1.msra.mxu0 0.0
    %231 = vmatprep.subr.mxu0 0.0
    %232 = vmatpush1.msra.mxu0 0.0
    %233 = vmatprep.subr.mxu0 0.0
    %234 = vmatpush1.msra.mxu0 0.0
    %235 = vmatprep.subr.mxu0 0.0
    %236 = vmatpush1.msra.mxu0 0.0
    %237 = vmatprep.subr.mxu0 0.0
    %238 = vmatpush1.msra.mxu0 0.0
    %239 = vmatprep.subr.mxu0 0.0
    %240 = vmatpush1.msra.mxu0 0.0
    %241 = vmatprep.mubr.f32.mxu0 0.0
    %242 = vmatmul.mubr.f32.gmra.mrb[0].mxu0 %v175
    %v243 = vpop.f32.mrb[0].mxu0
    %v244 = vadd.f32 0.0, %v243
    %v245 = vpop.f32.mrb[0].mxu0
    %246 = vdwg.mxu0
    %v247 = vadd.f32 %v162, %v244
    %v248 = vtanh.pop %v247
    %v249 = vxor.u32 %v247, 2147483648
    %v250 = vmul.f32 %v249, 1.442695
    %v251 = vpow.pop %v250
    %v252 = vadd.f32 %v251, 1.0
    %v253 = vrcp.pop %v252
    %v254 = vmul.f32 1.0, %v253
    %v255 = vsel %vm173, %v248, %v254
    %v256 = vmul.f32 %v255, 0.0
    %258 = vrot.lane.b32.xlu0 %v255, 64
    %v259 = vpop.permute.xlu0 %258
    %v261 = vmul.f32 %v255, %v259
    %263 = vrot.lane.b32.xlu0 %v261, 32
    %v264 = vpop.permute.xlu0 %263
    %v266 = vadd.f32 %v256, %v264
    %v267 = vtanh.pop %v266
    %269 = vrot.lane.b32.xlu0 %v267, 64
    %v270 = vpop.permute.xlu0 %269
    %v272 = vmul.f32 %v255, %v270
    %274 = vrot.lane.b32.xlu0 %v272, 32
    %v275 = vpop.permute.xlu0 %274
    %v276 = vsel %vm61, %v275, 0
    %278 = vmatprep.subr.mxu0 0.0
    %279 = vmatpush1.msra.mxu0 %v165
    %280 = vmatprep.subr.mxu0 0.0
    %281 = vmatpush1.msra.mxu0 %v166
    %282 = vmatprep.subr.mxu0 0.0
    %283 = vmatpush1.msra.mxu0 %v167
    %284 = vmatprep.subr.mxu0 0.0
    %285 = vmatpush1.msra.mxu0 %v168
    %286 = vmatprep.subr.mxu0 0.0
    %287 = vmatpush1.msra.mxu0 0.0
    %288 = vmatprep.subr.mxu0 0.0
    %289 = vmatpush1.msra.mxu0 0.0
    %290 = vmatprep.subr.mxu0 0.0
    %291 = vmatpush1.msra.mxu0 0.0
    %292 = vmatprep.subr.mxu0 0.0
    %293 = vmatpush1.msra.mxu0 0.0
    %294 = vmatprep.subr.mxu0 0.0
    %295 = vmatpush1.msra.mxu0 0.0
    %296 = vmatprep.subr.mxu0 0.0
    %297 = vmatpush1.msra.mxu0 0.0
    %298 = vmatprep.subr.mxu0 0.0
    %299 = vmatpush1.msra.mxu0 0.0
    %300 = vmatprep.subr.mxu0 0.0
    %301 = vmatpush1.msra.mxu0 0.0
    %302 = vmatprep.subr.mxu0 0.0
    %303 = vmatpush1.msra.mxu0 0.0
    %304 = vmatprep.subr.mxu0 0.0
    %305 = vmatpush1.msra.mxu0 0.0
    %306 = vmatprep.subr.mxu0 0.0
    %307 = vmatpush1.msra.mxu0 0.0
    %308 = vmatprep.subr.mxu0 0.0
    %309 = vmatpush1.msra.mxu0 0.0
    %310 = vmatprep.subr.mxu0 0.0
    %311 = vmatpush1.msra.mxu0 0.0
    %312 = vmatprep.subr.mxu0 0.0
    %313 = vmatpush1.msra.mxu0 0.0
    %314 = vmatprep.subr.mxu0 0.0
    %315 = vmatpush1.msra.mxu0 0.0
    %316 = vmatprep.subr.mxu0 0.0
    %317 = vmatpush1.msra.mxu0 0.0
    %318 = vmatprep.subr.mxu0 0.0
    %319 = vmatpush1.msra.mxu0 0.0
    %320 = vmatprep.subr.mxu0 0.0
    %321 = vmatpush1.msra.mxu0 0.0
    %322 = vmatprep.subr.mxu0 0.0
    %323 = vmatpush1.msra.mxu0 0.0
    %324 = vmatprep.subr.mxu0 0.0
    %325 = vmatpush1.msra.mxu0 0.0
    %326 = vmatprep.subr.mxu0 0.0
    %327 = vmatpush1.msra.mxu0 0.0
    %328 = vmatprep.subr.mxu0 0.0
    %329 = vmatpush1.msra.mxu0 0.0
    %330 = vmatprep.subr.mxu0 0.0
    %331 = vmatpush1.msra.mxu0 0.0
    %332 = vmatprep.subr.mxu0 0.0
    %333 = vmatpush1.msra.mxu0 0.0
    %334 = vmatprep.subr.mxu0 0.0
    %335 = vmatpush1.msra.mxu0 0.0
    %336 = vmatprep.subr.mxu0 0.0
    %337 = vmatpush1.msra.mxu0 0.0
    %338 = vmatprep.subr.mxu0 0.0
    %339 = vmatpush1.msra.mxu0 0.0
    %340 = vmatprep.subr.mxu0 0.0
    %341 = vmatpush1.msra.mxu0 0.0
    %342 = vmatprep.mubr.f32.mxu0 0.0
    %343 = vmatmul.mubr.f32.gmra.mrb[0].mxu0 %v276
    %v344 = vpop.f32.mrb[0].mxu0
    %v345 = vadd.f32 0.0, %v344
    %v346 = vpop.f32.mrb[0].mxu0
    %347 = vdwg.mxu0
    %v348 = vadd.f32 %v162, %v345
    %v349 = vtanh.pop %v348
    %v350 = vxor.u32 %v348, 2147483648
    %v351 = vmul.f32 %v350, 1.442695
    %v352 = vpow.pop %v351
    %v353 = vadd.f32 %v352, 1.0
    %v354 = vrcp.pop %v353
    %v355 = vmul.f32 1.0, %v354
    %v356 = vsel %vm173, %v349, %v355
    %v357 = vmul.f32 %v356, %v266
    %359 = vrot.lane.b32.xlu0 %v356, 64
    %v360 = vpop.permute.xlu0 %359
    %v362 = vmul.f32 %v356, %v360
    %364 = vrot.lane.b32.xlu0 %v362, 32
    %v365 = vpop.permute.xlu0 %364
    %v367 = vadd.f32 %v357, %v365
    %v368 = vtanh.pop %v367
    %370 = vrot.lane.b32.xlu0 %v368, 64
    %v371 = vpop.permute.xlu0 %370
    %v373 = vmul.f32 %v356, %v371
    %375 = vrot.lane.b32.xlu0 %v373, 32
    %v376 = vpop.permute.xlu0 %375
    %v377 = vsel %vm61, %v376, 0
    %379 = vmatprep.subr.mxu0 0.0
    %380 = vmatpush1.msra.mxu0 %v165
    %381 = vmatprep.subr.mxu0 0.0
    %382 = vmatpush1.msra.mxu0 %v166
    %383 = vmatprep.subr.mxu0 0.0
    %384 = vmatpush1.msra.mxu0 %v167
    %385 = vmatprep.subr.mxu0 0.0
    %386 = vmatpush1.msra.mxu0 %v168
    %387 = vmatprep.subr.mxu0 0.0
    %388 = vmatpush1.msra.mxu0 0.0
    %389 = vmatprep.subr.mxu0 0.0
    %390 = vmatpush1.msra.mxu0 0.0
    %391 = vmatprep.subr.mxu0 0.0
    %392 = vmatpush1.msra.mxu0 0.0
    %393 = vmatprep.subr.mxu0 0.0
    %394 = vmatpush1.msra.mxu0 0.0
    %395 = vmatprep.subr.mxu0 0.0
    %396 = vmatpush1.msra.mxu0 0.0
    %397 = vmatprep.subr.mxu0 0.0
    %398 = vmatpush1.msra.mxu0 0.0
    %399 = vmatprep.subr.mxu0 0.0
    %400 = vmatpush1.msra.mxu0 0.0
    %401 = vmatprep.subr.mxu0 0.0
    %402 = vmatpush1.msra.mxu0 0.0
    %403 = vmatprep.subr.mxu0 0.0
    %404 = vmatpush1.msra.mxu0 0.0
    %405 = vmatprep.subr.mxu0 0.0
    %406 = vmatpush1.msra.mxu0 0.0
    %407 = vmatprep.subr.mxu0 0.0
    %408 = vmatpush1.msra.mxu0 0.0
    %409 = vmatprep.subr.mxu0 0.0
    %410 = vmatpush1.msra.mxu0 0.0
    %411 = vmatprep.subr.mxu0 0.0
    %412 = vmatpush1.msra.mxu0 0.0
    %413 = vmatprep.subr.mxu0 0.0
    %414 = vmatpush1.msra.mxu0 0.0
    %415 = vmatprep.subr.mxu0 0.0
    %416 = vmatpush1.msra.mxu0 0.0
    %417 = vmatprep.subr.mxu0 0.0
    %418 = vmatpush1.msra.mxu0 0.0
    %419 = vmatprep.subr.mxu0 0.0
    %420 = vmatpush1.msra.mxu0 0.0
    %421 = vmatprep.subr.mxu0 0.0
    %422 = vmatpush1.msra.mxu0 0.0
    %423 = vmatprep.subr.mxu0 0.0
    %424 = vmatpush1.msra.mxu0 0.0
    %425 = vmatprep.subr.mxu0 0.0
    %426 = vmatpush1.msra.mxu0 0.0
    %427 = vmatprep.subr.mxu0 0.0
    %428 = vmatpush1.msra.mxu0 0.0
    %429 = vmatprep.subr.mxu0 0.0
    %430 = vmatpush1.msra.mxu0 0.0
    %431 = vmatprep.subr.mxu0 0.0
    %432 = vmatpush1.msra.mxu0 0.0
    %433 = vmatprep.subr.mxu0 0.0
    %434 = vmatpush1.msra.mxu0 0.0
    %435 = vmatprep.subr.mxu0 0.0
    %436 = vmatpush1.msra.mxu0 0.0
    %437 = vmatprep.subr.mxu0 0.0
    %438 = vmatpush1.msra.mxu0 0.0
    %439 = vmatprep.subr.mxu0 0.0
    %440 = vmatpush1.msra.mxu0 0.0
    %441 = vmatprep.subr.mxu0 0.0
    %442 = vmatpush1.msra.mxu0 0.0
    %443 = vmatprep.mubr.f32.mxu0 0.0
    %444 = vmatmul.mubr.f32.gmra.mrb[0].mxu0 %v377
    %v445 = vpop.f32.mrb[0].mxu0
    %v446 = vadd.f32 0.0, %v445
    %v447 = vpop.f32.mrb[0].mxu0
    %448 = vdwg.mxu0
    %v449 = vadd.f32 %v162, %v446
    %v450 = vtanh.pop %v449
    %v451 = vxor.u32 %v449, 2147483648
    %v452 = vmul.f32 %v451, 1.442695
    %v453 = vpow.pop %v452
    %v454 = vadd.f32 %v453, 1.0
    %v455 = vrcp.pop %v454
    %v456 = vmul.f32 1.0, %v455
    %v457 = vsel %vm173, %v450, %v456
    %v458 = vmul.f32 %v457, %v367
    %460 = vrot.lane.b32.xlu0 %v457, 64
    %v461 = vpop.permute.xlu0 %460
    %v463 = vmul.f32 %v457, %v461
    %465 = vrot.lane.b32.xlu0 %v463, 32
    %v466 = vpop.permute.xlu0 %465
    %v468 = vadd.f32 %v458, %v466
    %v469 = vtanh.pop %v468
    %471 = vrot.lane.b32.xlu0 %v469, 64
    %v472 = vpop.permute.xlu0 %471
    %v474 = vmul.f32 %v457, %v472
    %476 = vrot.lane.b32.xlu0 %v474, 32
    %v477 = vpop.permute.xlu0 %476
    %v478 = vsel %vm61, %v477, 0
    %480 = vmatprep.subr.mxu0 0.0
    %481 = vmatpush1.msra.mxu0 %v165
    %482 = vmatprep.subr.mxu0 0.0
    %483 = vmatpush1.msra.mxu0 %v166
    %484 = vmatprep.subr.mxu0 0.0
    %485 = vmatpush1.msra.mxu0 %v167
    %486 = vmatprep.subr.mxu0 0.0
    %487 = vmatpush1.msra.mxu0 %v168
    %488 = vmatprep.subr.mxu0 0.0
    %489 = vmatpush1.msra.mxu0 0.0
    %490 = vmatprep.subr.mxu0 0.0
    %491 = vmatpush1.msra.mxu0 0.0
    %492 = vmatprep.subr.mxu0 0.0
    %493 = vmatpush1.msra.mxu0 0.0
    %494 = vmatprep.subr.mxu0 0.0
    %495 = vmatpush1.msra.mxu0 0.0
    %496 = vmatprep.subr.mxu0 0.0
    %497 = vmatpush1.msra.mxu0 0.0
    %498 = vmatprep.subr.mxu0 0.0
    %499 = vmatpush1.msra.mxu0 0.0
    %500 = vmatprep.subr.mxu0 0.0
    %501 = vmatpush1.msra.mxu0 0.0
    %502 = vmatprep.subr.mxu0 0.0
    %503 = vmatpush1.msra.mxu0 0.0
    %504 = vmatprep.subr.mxu0 0.0
    %505 = vmatpush1.msra.mxu0 0.0
    %506 = vmatprep.subr.mxu0 0.0
    %507 = vmatpush1.msra.mxu0 0.0
    %508 = vmatprep.subr.mxu0 0.0
    %509 = vmatpush1.msra.mxu0 0.0
    %510 = vmatprep.subr.mxu0 0.0
    %511 = vmatpush1.msra.mxu0 0.0
    %512 = vmatprep.subr.mxu0 0.0
    %513 = vmatpush1.msra.mxu0 0.0
    %514 = vmatprep.subr.mxu0 0.0
    %515 = vmatpush1.msra.mxu0 0.0
    %516 = vmatprep.subr.mxu0 0.0
    %517 = vmatpush1.msra.mxu0 0.0
    %518 = vmatprep.subr.mxu0 0.0
    %519 = vmatpush1.msra.mxu0 0.0
    %520 = vmatprep.subr.mxu0 0.0
    %521 = vmatpush1.msra.mxu0 0.0
    %522 = vmatprep.subr.mxu0 0.0
    %523 = vmatpush1.msra.mxu0 0.0
    %524 = vmatprep.subr.mxu0 0.0
    %525 = vmatpush1.msra.mxu0 0.0
    %526 = vmatprep.subr.mxu0 0.0
    %527 = vmatpush1.msra.mxu0 0.0
    %528 = vmatprep.subr.mxu0 0.0
    %529 = vmatpush1.msra.mxu0 0.0
    %530 = vmatprep.subr.mxu0 0.0
    %531 = vmatpush1.msra.mxu0 0.0
    %532 = vmatprep.subr.mxu0 0.0
    %533 = vmatpush1.msra.mxu0 0.0
    %534 = vmatprep.subr.mxu0 0.0
    %535 = vmatpush1.msra.mxu0 0.0
    %536 = vmatprep.subr.mxu0 0.0
    %537 = vmatpush1.msra.mxu0 0.0
    %538 = vmatprep.subr.mxu0 0.0
    %539 = vmatpush1.msra.mxu0 0.0
    %540 = vmatprep.subr.mxu0 0.0
    %541 = vmatpush1.msra.mxu0 0.0
    %542 = vmatprep.subr.mxu0 0.0
    %543 = vmatpush1.msra.mxu0 0.0
    %544 = vmatprep.mubr.f32.mxu0 0.0
    %545 = vmatmul.mubr.f32.gmra.mrb[0].mxu0 %v478
    %v546 = vpop.f32.mrb[0].mxu0
    %v547 = vadd.f32 0.0, %v546
    %v548 = vpop.f32.mrb[0].mxu0
    %549 = vdwg.mxu0
    %v550 = vadd.f32 %v162, %v547
    %v551 = vtanh.pop %v550
    %v552 = vxor.u32 %v550, 2147483648
    %v553 = vmul.f32 %v552, 1.442695
    %v554 = vpow.pop %v553
    %v555 = vadd.f32 %v554, 1.0
    %v556 = vrcp.pop %v555
    %v557 = vmul.f32 1.0, %v556
    %v558 = vsel %vm173, %v551, %v557
    %v559 = vmul.f32 %v558, %v468
    %561 = vrot.lane.b32.xlu0 %v558, 64
    %v562 = vpop.permute.xlu0 %561
    %v564 = vmul.f32 %v558, %v562
    %566 = vrot.lane.b32.xlu0 %v564, 32
    %v567 = vpop.permute.xlu0 %566
    %v569 = vadd.f32 %v559, %v567
    %v570 = vtanh.pop %v569
    %572 = vrot.lane.b32.xlu0 %v570, 64
    %v573 = vpop.permute.xlu0 %572
    %v575 = vmul.f32 %v558, %v573
    %577 = vrot.lane.b32.xlu0 %v575, 32
    %v578 = vpop.permute.xlu0 %577
    %v579 = vsel %vm61, %v578, 0
    %581 = vmatprep.subr.mxu0 0.0
    %582 = vmatpush1.msra.mxu0 %v165
    %583 = vmatprep.subr.mxu0 0.0
    %584 = vmatpush1.msra.mxu0 %v166
    %585 = vmatprep.subr.mxu0 0.0
    %586 = vmatpush1.msra.mxu0 %v167
    %587 = vmatprep.subr.mxu0 0.0
    %588 = vmatpush1.msra.mxu0 %v168
    %589 = vmatprep.subr.mxu0 0.0
    %590 = vmatpush1.msra.mxu0 0.0
    %591 = vmatprep.subr.mxu0 0.0
    %592 = vmatpush1.msra.mxu0 0.0
    %593 = vmatprep.subr.mxu0 0.0
    %594 = vmatpush1.msra.mxu0 0.0
    %595 = vmatprep.subr.mxu0 0.0
    %596 = vmatpush1.msra.mxu0 0.0
    %597 = vmatprep.subr.mxu0 0.0
    %598 = vmatpush1.msra.mxu0 0.0
    %599 = vmatprep.subr.mxu0 0.0
    %600 = vmatpush1.msra.mxu0 0.0
    %601 = vmatprep.subr.mxu0 0.0
    %602 = vmatpush1.msra.mxu0 0.0
    %603 = vmatprep.subr.mxu0 0.0
    %604 = vmatpush1.msra.mxu0 0.0
    %605 = vmatprep.subr.mxu0 0.0
    %606 = vmatpush1.msra.mxu0 0.0
    %607 = vmatprep.subr.mxu0 0.0
    %608 = vmatpush1.msra.mxu0 0.0
    %609 = vmatprep.subr.mxu0 0.0
    %610 = vmatpush1.msra.mxu0 0.0
    %611 = vmatprep.subr.mxu0 0.0
    %612 = vmatpush1.msra.mxu0 0.0
    %613 = vmatprep.subr.mxu0 0.0
    %614 = vmatpush1.msra.mxu0 0.0
    %615 = vmatprep.subr.mxu0 0.0
    %616 = vmatpush1.msra.mxu0 0.0
    %617 = vmatprep.subr.mxu0 0.0
    %618 = vmatpush1.msra.mxu0 0.0
    %619 = vmatprep.subr.mxu0 0.0
    %620 = vmatpush1.msra.mxu0 0.0
    %621 = vmatprep.subr.mxu0 0.0
    %622 = vmatpush1.msra.mxu0 0.0
    %623 = vmatprep.subr.mxu0 0.0
    %624 = vmatpush1.msra.mxu0 0.0
    %625 = vmatprep.subr.mxu0 0.0
    %626 = vmatpush1.msra.mxu0 0.0
    %627 = vmatprep.subr.mxu0 0.0
    %628 = vmatpush1.msra.mxu0 0.0
    %629 = vmatprep.subr.mxu0 0.0
    %630 = vmatpush1.msra.mxu0 0.0
    %631 = vmatprep.subr.mxu0 0.0
    %632 = vmatpush1.msra.mxu0 0.0
    %633 = vmatprep.subr.mxu0 0.0
    %634 = vmatpush1.msra.mxu0 0.0
    %635 = vmatprep.subr.mxu0 0.0
    %636 = vmatpush1.msra.mxu0 0.0
    %637 = vmatprep.subr.mxu0 0.0
    %638 = vmatpush1.msra.mxu0 0.0
    %639 = vmatprep.subr.mxu0 0.0
    %640 = vmatpush1.msra.mxu0 0.0
    %641 = vmatprep.subr.mxu0 0.0
    %642 = vmatpush1.msra.mxu0 0.0
    %643 = vmatprep.subr.mxu0 0.0
    %644 = vmatpush1.msra.mxu0 0.0
    %645 = vmatprep.mubr.f32.mxu0 0.0
    %646 = vmatmul.mubr.f32.gmra.mrb[0].mxu0 %v579
    %v647 = vpop.f32.mrb[0].mxu0
    %v648 = vadd.f32 0.0, %v647
    %v649 = vpop.f32.mrb[0].mxu0
    %650 = vdwg.mxu0
    %v651 = vadd.f32 %v162, %v648
    %v652 = vtanh.pop %v651
    %v653 = vxor.u32 %v651, 2147483648
    %v654 = vmul.f32 %v653, 1.442695
    %v655 = vpow.pop %v654
    %v656 = vadd.f32 %v655, 1.0
    %v657 = vrcp.pop %v656
    %v658 = vmul.f32 1.0, %v657
    %v659 = vsel %vm173, %v652, %v658
    %v660 = vmul.f32 %v659, %v569
    %662 = vrot.lane.b32.xlu0 %v659, 64
    %v663 = vpop.permute.xlu0 %662
    %v665 = vmul.f32 %v659, %v663
    %667 = vrot.lane.b32.xlu0 %v665, 32
    %v668 = vpop.permute.xlu0 %667
    %v670 = vadd.f32 %v660, %v668
    %v671 = vtanh.pop %v670
    %673 = vrot.lane.b32.xlu0 %v671, 64
    %v674 = vpop.permute.xlu0 %673
    %v676 = vmul.f32 %v659, %v674
    %678 = vrot.lane.b32.xlu0 %v676, 32
    %v679 = vpop.permute.xlu0 %678
    %v680 = vsel %vm61, %v679, 0
    %682 = vmatprep.subr.mxu0 0.0
    %683 = vmatpush1.msra.mxu0 %v165
    %684 = vmatprep.subr.mxu0 0.0
    %685 = vmatpush1.msra.mxu0 %v166
    %686 = vmatprep.subr.mxu0 0.0
    %687 = vmatpush1.msra.mxu0 %v167
    %688 = vmatprep.subr.mxu0 0.0
    %689 = vmatpush1.msra.mxu0 %v168
    %690 = vmatprep.subr.mxu0 0.0
    %691 = vmatpush1.msra.mxu0 0.0
    %692 = vmatprep.subr.mxu0 0.0
    %693 = vmatpush1.msra.mxu0 0.0
    %694 = vmatprep.subr.mxu0 0.0
    %695 = vmatpush1.msra.mxu0 0.0
    %696 = vmatprep.subr.mxu0 0.0
    %697 = vmatpush1.msra.mxu0 0.0
    %698 = vmatprep.subr.mxu0 0.0
    %699 = vmatpush1.msra.mxu0 0.0
    %700 = vmatprep.subr.mxu0 0.0
    %701 = vmatpush1.msra.mxu0 0.0
    %702 = vmatprep.subr.mxu0 0.0
    %703 = vmatpush1.msra.mxu0 0.0
    %704 = vmatprep.subr.mxu0 0.0
    %705 = vmatpush1.msra.mxu0 0.0
    %706 = vmatprep.subr.mxu0 0.0
    %707 = vmatpush1.msra.mxu0 0.0
    %708 = vmatprep.subr.mxu0 0.0
    %709 = vmatpush1.msra.mxu0 0.0
    %710 = vmatprep.subr.mxu0 0.0
    %711 = vmatpush1.msra.mxu0 0.0
    %712 = vmatprep.subr.mxu0 0.0
    %713 = vmatpush1.msra.mxu0 0.0
    %714 = vmatprep.subr.mxu0 0.0
    %715 = vmatpush1.msra.mxu0 0.0
    %716 = vmatprep.subr.mxu0 0.0
    %717 = vmatpush1.msra.mxu0 0.0
    %718 = vmatprep.subr.mxu0 0.0
    %719 = vmatpush1.msra.mxu0 0.0
    %720 = vmatprep.subr.mxu0 0.0
    %721 = vmatpush1.msra.mxu0 0.0
    %722 = vmatprep.subr.mxu0 0.0
    %723 = vmatpush1.msra.mxu0 0.0
    %724 = vmatprep.subr.mxu0 0.0
    %725 = vmatpush1.msra.mxu0 0.0
    %726 = vmatprep.subr.mxu0 0.0
    %727 = vmatpush1.msra.mxu0 0.0
    %728 = vmatprep.subr.mxu0 0.0
    %729 = vmatpush1.msra.mxu0 0.0
    %730 = vmatprep.subr.mxu0 0.0
    %731 = vmatpush1.msra.mxu0 0.0
    %732 = vmatprep.subr.mxu0 0.0
    %733 = vmatpush1.msra.mxu0 0.0
    %734 = vmatprep.subr.mxu0 0.0
    %735 = vmatpush1.msra.mxu0 0.0
    %736 = vmatprep.subr.mxu0 0.0
    %737 = vmatpush1.msra.mxu0 0.0
    %738 = vmatprep.subr.mxu0 0.0
    %739 = vmatpush1.msra.mxu0 0.0
    %740 = vmatprep.subr.mxu0 0.0
    %741 = vmatpush1.msra.mxu0 0.0
    %742 = vmatprep.subr.mxu0 0.0
    %743 = vmatpush1.msra.mxu0 0.0
    %744 = vmatprep.subr.mxu0 0.0
    %745 = vmatpush1.msra.mxu0 0.0
    %746 = vmatprep.mubr.f32.mxu0 0.0
    %747 = vmatmul.mubr.f32.gmra.mrb[0].mxu0 %v680
    %v748 = vpop.f32.mrb[0].mxu0
    %v749 = vadd.f32 0.0, %v748
    %v750 = vpop.f32.mrb[0].mxu0
    %751 = vdwg.mxu0
    %v752 = vadd.f32 %v162, %v749
    %v753 = vtanh.pop %v752
    %v754 = vxor.u32 %v752, 2147483648
    %v755 = vmul.f32 %v754, 1.442695
    %v756 = vpow.pop %v755
    %v757 = vadd.f32 %v756, 1.0
    %v758 = vrcp.pop %v757
    %v759 = vmul.f32 1.0, %v758
    %v760 = vsel %vm173, %v753, %v759
    %v761 = vmul.f32 %v760, %v670
    %763 = vrot.lane.b32.xlu0 %v760, 64
    %v764 = vpop.permute.xlu0 %763
    %v766 = vmul.f32 %v760, %v764
    %768 = vrot.lane.b32.xlu0 %v766, 32
    %v769 = vpop.permute.xlu0 %768
    %v771 = vadd.f32 %v761, %v769
    %v772 = vtanh.pop %v771
    %774 = vrot.lane.b32.xlu0 %v772, 64
    %v775 = vpop.permute.xlu0 %774
    %v777 = vmul.f32 %v760, %v775
    %779 = vrot.lane.b32.xlu0 %v777, 32
    %v780 = vpop.permute.xlu0 %779
    %v781 = vsel %vm61, %v780, 0
    %783 = vmatprep.subr.mxu0 0.0
    %784 = vmatpush1.msra.mxu0 %v165
    %785 = vmatprep.subr.mxu0 0.0
    %786 = vmatpush1.msra.mxu0 %v166
    %787 = vmatprep.subr.mxu0 0.0
    %788 = vmatpush1.msra.mxu0 %v167
    %789 = vmatprep.subr.mxu0 0.0
    %790 = vmatpush1.msra.mxu0 %v168
    %791 = vmatprep.subr.mxu0 0.0
    %792 = vmatpush1.msra.mxu0 0.0
    %793 = vmatprep.subr.mxu0 0.0
    %794 = vmatpush1.msra.mxu0 0.0
    %795 = vmatprep.subr.mxu0 0.0
    %796 = vmatpush1.msra.mxu0 0.0
    %797 = vmatprep.subr.mxu0 0.0
    %798 = vmatpush1.msra.mxu0 0.0
    %799 = vmatprep.subr.mxu0 0.0
    %800 = vmatpush1.msra.mxu0 0.0
    %801 = vmatprep.subr.mxu0 0.0
    %802 = vmatpush1.msra.mxu0 0.0
    %803 = vmatprep.subr.mxu0 0.0
    %804 = vmatpush1.msra.mxu0 0.0
    %805 = vmatprep.subr.mxu0 0.0
    %806 = vmatpush1.msra.mxu0 0.0
    %807 = vmatprep.subr.mxu0 0.0
    %808 = vmatpush1.msra.mxu0 0.0
    %809 = vmatprep.subr.mxu0 0.0
    %810 = vmatpush1.msra.mxu0 0.0
    %811 = vmatprep.subr.mxu0 0.0
    %812 = vmatpush1.msra.mxu0 0.0
    %813 = vmatprep.subr.mxu0 0.0
    %814 = vmatpush1.msra.mxu0 0.0
    %815 = vmatprep.subr.mxu0 0.0
    %816 = vmatpush1.msra.mxu0 0.0
    %817 = vmatprep.subr.mxu0 0.0
    %818 = vmatpush1.msra.mxu0 0.0
    %819 = vmatprep.subr.mxu0 0.0
    %820 = vmatpush1.msra.mxu0 0.0
    %821 = vmatprep.subr.mxu0 0.0
    %822 = vmatpush1.msra.mxu0 0.0
    %823 = vmatprep.subr.mxu0 0.0
    %824 = vmatpush1.msra.mxu0 0.0
    %825 = vmatprep.subr.mxu0 0.0
    %826 = vmatpush1.msra.mxu0 0.0
    %827 = vmatprep.subr.mxu0 0.0
    %828 = vmatpush1.msra.mxu0 0.0
    %829 = vmatprep.subr.mxu0 0.0
    %830 = vmatpush1.msra.mxu0 0.0
    %831 = vmatprep.subr.mxu0 0.0
    %832 = vmatpush1.msra.mxu0 0.0
    %833 = vmatprep.subr.mxu0 0.0
    %834 = vmatpush1.msra.mxu0 0.0
    %835 = vmatprep.subr.mxu0 0.0
    %836 = vmatpush1.msra.mxu0 0.0
    %837 = vmatprep.subr.mxu0 0.0
    %838 = vmatpush1.msra.mxu0 0.0
    %839 = vmatprep.subr.mxu0 0.0
    %840 = vmatpush1.msra.mxu0 0.0
    %841 = vmatprep.subr.mxu0 0.0
    %842 = vmatpush1.msra.mxu0 0.0
    %843 = vmatprep.subr.mxu0 0.0
    %844 = vmatpush1.msra.mxu0 0.0
    %845 = vmatprep.subr.mxu0 0.0
    %846 = vmatpush1.msra.mxu0 0.0
    %847 = vmatprep.mubr.f32.mxu0 0.0
    %848 = vmatmul.mubr.f32.gmra.mrb[0].mxu0 %v781
    %v849 = vpop.f32.mrb[0].mxu0
    %v850 = vadd.f32 0.0, %v849
    %v851 = vpop.f32.mrb[0].mxu0
    %852 = vdwg.mxu0
    %v853 = vadd.f32 %v162, %v850
    %v854 = vtanh.pop %v853
    %v855 = vxor.u32 %v853, 2147483648
    %v856 = vmul.f32 %v855, 1.442695
    %v857 = vpow.pop %v856
    %v858 = vadd.f32 %v857, 1.0
    %v859 = vrcp.pop %v858
    %v860 = vmul.f32 1.0, %v859
    %v861 = vsel %vm173, %v854, %v860
    %v862 = vmul.f32 %v861, %v771
    %864 = vrot.lane.b32.xlu0 %v861, 64
    %v865 = vpop.permute.xlu0 %864
    %v867 = vmul.f32 %v861, %v865
    %869 = vrot.lane.b32.xlu0 %v867, 32
    %v870 = vpop.permute.xlu0 %869
    %v872 = vadd.f32 %v862, %v870
    %v873 = vtanh.pop %v872
    %875 = vrot.lane.b32.xlu0 %v873, 64
    %v876 = vpop.permute.xlu0 %875
    %v878 = vmul.f32 %v861, %v876
    %880 = vrot.lane.b32.xlu0 %v878, 32
    %v881 = vpop.permute.xlu0 %880
    %v882 = vsel %vm61, %v881, 0
    %884 = vmatprep.subr.mxu0 0.0
    %885 = vmatpush1.msra.mxu0 %v165
    %886 = vmatprep.subr.mxu0 0.0
    %887 = vmatpush1.msra.mxu0 %v166
    %888 = vmatprep.subr.mxu0 0.0
    %889 = vmatpush1.msra.mxu0 %v167
    %890 = vmatprep.subr.mxu0 0.0
    %891 = vmatpush1.msra.mxu0 %v168
    %892 = vmatprep.subr.mxu0 0.0
    %893 = vmatpush1.msra.mxu0 0.0
    %894 = vmatprep.subr.mxu0 0.0
    %895 = vmatpush1.msra.mxu0 0.0
    %896 = vmatprep.subr.mxu0 0.0
    %897 = vmatpush1.msra.mxu0 0.0
    %898 = vmatprep.subr.mxu0 0.0
    %899 = vmatpush1.msra.mxu0 0.0
    %900 = vmatprep.subr.mxu0 0.0
    %901 = vmatpush1.msra.mxu0 0.0
    %902 = vmatprep.subr.mxu0 0.0
    %903 = vmatpush1.msra.mxu0 0.0
    %904 = vmatprep.subr.mxu0 0.0
    %905 = vmatpush1.msra.mxu0 0.0
    %906 = vmatprep.subr.mxu0 0.0
    %907 = vmatpush1.msra.mxu0 0.0
    %908 = vmatprep.subr.mxu0 0.0
    %909 = vmatpush1.msra.mxu0 0.0
    %910 = vmatprep.subr.mxu0 0.0
    %911 = vmatpush1.msra.mxu0 0.0
    %912 = vmatprep.subr.mxu0 0.0
    %913 = vmatpush1.msra.mxu0 0.0
    %914 = vmatprep.subr.mxu0 0.0
    %915 = vmatpush1.msra.mxu0 0.0
    %916 = vmatprep.subr.mxu0 0.0
    %917 = vmatpush1.msra.mxu0 0.0
    %918 = vmatprep.subr.mxu0 0.0
    %919 = vmatpush1.msra.mxu0 0.0
    %920 = vmatprep.subr.mxu0 0.0
    %921 = vmatpush1.msra.mxu0 0.0
    %922 = vmatprep.subr.mxu0 0.0
    %923 = vmatpush1.msra.mxu0 0.0
    %924 = vmatprep.subr.mxu0 0.0
    %925 = vmatpush1.msra.mxu0 0.0
    %926 = vmatprep.subr.mxu0 0.0
    %927 = vmatpush1.msra.mxu0 0.0
    %928 = vmatprep.subr.mxu0 0.0
    %929 = vmatpush1.msra.mxu0 0.0
    %930 = vmatprep.subr.mxu0 0.0
    %931 = vmatpush1.msra.mxu0 0.0
    %932 = vmatprep.subr.mxu0 0.0
    %933 = vmatpush1.msra.mxu0 0.0
    %934 = vmatprep.subr.mxu0 0.0
    %935 = vmatpush1.msra.mxu0 0.0
    %936 = vmatprep.subr.mxu0 0.0
    %937 = vmatpush1.msra.mxu0 0.0
    %938 = vmatprep.subr.mxu0 0.0
    %939 = vmatpush1.msra.mxu0 0.0
    %940 = vmatprep.subr.mxu0 0.0
    %941 = vmatpush1.msra.mxu0 0.0
    %942 = vmatprep.subr.mxu0 0.0
    %943 = vmatpush1.msra.mxu0 0.0
    %944 = vmatprep.subr.mxu0 0.0
    %945 = vmatpush1.msra.mxu0 0.0
    %946 = vmatprep.subr.mxu0 0.0
    %947 = vmatpush1.msra.mxu0 0.0
    %948 = vmatprep.mubr.f32.mxu0 0.0
    %949 = vmatmul.mubr.f32.gmra.mrb[0].mxu0 %v882
    %v950 = vpop.f32.mrb[0].mxu0
    %v951 = vadd.f32 0.0, %v950
    %v952 = vpop.f32.mrb[0].mxu0
    %953 = vdwg.mxu0
    %v954 = vadd.f32 %v162, %v951
    %v955 = vtanh.pop %v954
    %v956 = vxor.u32 %v954, 2147483648
    %v957 = vmul.f32 %v956, 1.442695
    %v958 = vpow.pop %v957
    %v959 = vadd.f32 %v958, 1.0
    %v960 = vrcp.pop %v959
    %v961 = vmul.f32 1.0, %v960
    %v962 = vsel %vm173, %v955, %v961
    %v963 = vmul.f32 %v962, %v872
    %965 = vrot.lane.b32.xlu0 %v962, 64
    %v966 = vpop.permute.xlu0 %965
    %v968 = vmul.f32 %v962, %v966
    %970 = vrot.lane.b32.xlu0 %v968, 32
    %v971 = vpop.permute.xlu0 %970
    %v973 = vadd.f32 %v963, %v971
    %v974 = vtanh.pop %v973
    %976 = vrot.lane.b32.xlu0 %v974, 64
    %v977 = vpop.permute.xlu0 %976
    %v979 = vmul.f32 %v962, %v977
    %981 = vrot.lane.b32.xlu0 %v373, 64
    %v982 = vpop.permute.xlu0 %981
    %984 = vrot.lane.b32.xlu0 %v474, 96
    %v985 = vpop.permute.xlu0 %984
    %988 = vrot.lane.b32.xlu0 %v777, 64
    %v989 = vpop.permute.xlu0 %988
    %991 = vrot.lane.b32.xlu0 %v878, 96
    %v992 = vpop.permute.xlu0 %991
    %v994 = vsel %vm61, %v275, %v982
    %vm995 = vcmask 523264
    %v996 = vsel %vm995, %v994, %v985
    %vm997 = vcmask 785408
    %v998 = vsel %vm997, %v996, %v575
    %v999 = vsel %vm61, %v679, %v989
    %v1000 = vsel %vm995, %v999, %v992
    %v1001 = vsel %vm997, %v1000, %v979
    %v1004 = vcombine.low %v998, %v1001
    %v1006 = vunpack.c.l.s4 1983009808
    %v1007 = vunpack.c.0.s8 %v1006
    %v1008 = vlaneseq
    %v1009 = vshrl.u32 %v1008, 7
    %v1010 = vsub.s32 %v1007, %v1009
    %v1011 = vrot.slane %v1004, %v1010
    %1013 = vst [vmem:[#allocation8] sm:$0xf] %v1011
    // Predicated region
    $region30: #{tpu_custom_call.1} parent=1 // pred_check
      _
    $region31: #{tpu_custom_call.1} parent=1 // pred_check_branch
      %1015 = sbr.rel (0) target = $region33
    $region32: #{tpu_custom_call.1} parent=1 // pred_region
      %s1017 = ssub.s32 64, 64
      %1018 = vsyncadd [#allocation4], %s1017
      %s1020 = sshll.u32 [#allocation8], 4
      %s1021 = int_to_ptr.vmem [resolvable:$true] %s1020
      %1023 = dma.vmem_to_hbm [thread:$0]  %s1021, 64, %s4, [#allocation4]
    $region33: #{tpu_custom_call.1} parent=1 // pred_fallthru
      _
    // Predicated region
    $region34: #{tpu_custom_call.1} parent=1 // pred_check
      _
    $region35: #{tpu_custom_call.1} parent=1 // pred_check_branch
      %1025 = sbr.rel (0) target = $region37
    $region36: #{tpu_custom_call.1} parent=1 // pred_region
      %1026 = dma.done [#allocation4], 64
    $region37: #{tpu_custom_call.1} parent=1 // pred_fallthru
      _
    %1027 = vsyncpa [#allocation3], 1
    %1028 = vsyncpa [#allocation6], 1
    %1029 = vsyncpa [#allocation4], 1

</llo_original>
